<compile_context>
chip_gen: v5e
topology: v5e:2x2
jax: 0.10.0
libtpu: 0.0.40
codegen_flags: <defaults>
</compile_context>

<pallas_src>
import functools

import jax
import jax.numpy as jnp
from jax.experimental import pallas as pl
from jax.experimental.pallas import tpu as pltpu

HIDDEN = 32
LANES = 128


def _round_up(x: int, m: int) -> int:
    return ((x + m - 1) // m) * m


def _actor_kernel_factory(max_action: float):
    def kernel(x_ref, w1_ref, b1_ref, w2_ref, b2_ref, w3_ref, b3_ref, o_ref):
        # Layer 1: bf16 matmul, f32 accumulate, f32 bias + ReLU (VPU).
        x = x_ref[...]
        a = jnp.dot(x, w1_ref[...], preferred_element_type=jnp.float32) + b1_ref[...]
        a = jnp.maximum(a, 0.0)
        # Layer 2.
        a = jnp.dot(a.astype(jnp.bfloat16), w2_ref[...],
                    preferred_element_type=jnp.float32) + b2_ref[...]
        a = jnp.maximum(a, 0.0)
        # Layer 3 (output lanes padded to a multiple of 128): tanh (EUP) + scale.
        a = jnp.dot(a.astype(jnp.bfloat16), w3_ref[...],
                    preferred_element_type=jnp.float32) + b3_ref[...]
        o_ref[...] = (max_action * jnp.tanh(a)).astype(o_ref.dtype)

    return kernel


@functools.partial(jax.jit, static_argnames=("max_action", "tile_m"))
def actor_forward(state, params, max_action, tile_m: int = 512):
    """state: [B, state_dim] float32. params: dict of W1,b1,W2,b2,W3,b3
    (weights stored [in, out], biases [1, out])."""
    B, state_dim = state.shape
    action_dim = params["W3"].shape[1]

    # Batch tile: multiple of 16 (bf16 sublane packing), capped at `tile_m`.
    tm = min(tile_m, _round_up(B, 16))
    b_pad = _round_up(B, tm)
    grid = (b_pad // tm,)

    # Lane-dense output: pad the final layer's output features to 128 lanes.
    n_out = _round_up(action_dim, LANES)

    # Cast MXU operands to bf16 at the boundary; pad batch / output lanes.
    x = jnp.pad(state.astype(jnp.bfloat16), ((0, b_pad - B), (0, 0)))
    w1 = params["W1"].astype(jnp.bfloat16)
    w2 = params["W2"].astype(jnp.bfloat16)
    w3 = jnp.pad(params["W3"].astype(jnp.bfloat16),
                 ((0, 0), (0, n_out - action_dim)))
    b1 = params["b1"].astype(jnp.float32)
    b2 = params["b2"].astype(jnp.float32)
    b3 = jnp.pad(params["b3"].astype(jnp.float32),
                 ((0, 0), (0, n_out - action_dim)))

    kernel = _actor_kernel_factory(float(max_action))

    # Weights/biases: full-array blocks pinned across all grid steps.
    resident = lambda arr: pl.BlockSpec(arr.shape, lambda i: (0,) * arr.ndim)

    flops = 2 * B * (state_dim * HIDDEN + HIDDEN * HIDDEN + HIDDEN * action_dim)
    bytes_accessed = (
        x.size * 2                                   # bf16 state slab
        + (w1.size + w2.size + w3.size) * 2          # bf16 weights
        + (b1.size + b2.size + b3.size) * 4          # f32 biases
        + b_pad * n_out * 4                          # f32 padded output
    )

    out = pl.pallas_call(
        kernel,
        out_shape=jax.ShapeDtypeStruct((b_pad, n_out), jnp.float32),
        grid=grid,
        in_specs=[
            pl.BlockSpec((tm, state_dim), lambda i: (i, 0)),
            resident(w1), resident(b1),
            resident(w2), resident(b2),
            resident(w3), resident(b3),
        ],
        out_specs=pl.BlockSpec((tm, n_out), lambda i: (i, 0)),
        compiler_params=pltpu.CompilerParams(
            dimension_semantics=("parallel",),
        ),
        cost_estimate=pl.CostEstimate(
            flops=flops,
            transcendentals=B * action_dim,
            bytes_accessed=bytes_accessed,
        ),
    )(x, w1, b1, w2, b2, w3, b3)

    return out[:B, :action_dim]


def init_actor_params(key, state_dim, action_dim, hidden=HIDDEN):
    """Deterministic synthetic parameters (nn.Linear shapes, stored as [in, out])."""
    ks = jax.random.split(key, 6)
    scale1 = 1.0 / jnp.sqrt(state_dim)
    scale2 = 1.0 / jnp.sqrt(hidden)
    return {
        "W1": jax.random.uniform(ks[0], (state_dim, hidden), jnp.float32, -scale1, scale1),
        "b1": jax.random.uniform(ks[1], (1, hidden), jnp.float32, -scale1, scale1),
        "W2": jax.random.uniform(ks[2], (hidden, hidden), jnp.float32, -scale2, scale2),
        "b2": jax.random.uniform(ks[3], (1, hidden), jnp.float32, -scale2, scale2),
        "W3": jax.random.uniform(ks[4], (hidden, action_dim), jnp.float32, -scale2, scale2),
        "b3": jax.random.uniform(ks[5], (1, action_dim), jnp.float32, -scale2, scale2),
    }


def actor_reference(state, params, max_action):
    """Pure-JAX f32 reference for correctness check."""
    a = jnp.maximum(state @ params["W1"] + params["b1"], 0.0)
    a = jnp.maximum(a @ params["W2"] + params["b2"], 0.0)
    return max_action * jnp.tanh(a @ params["W3"] + params["b3"])


if __name__ == "__main__":
    key = jax.random.PRNGKey(0)
    k_state, k_params, k_big = jax.random.split(key, 3)

    batch = 2
    state_dim = 16
    action_dim = 4
    max_action = 2.0

    state = jax.random.normal(k_state, (batch, state_dim), jnp.float32)
    params = init_actor_params(k_params, state_dim, action_dim)

    # Small-batch check (kernel pads batch to the bf16 sublane tile).
    out = actor_forward(state, params, max_action)
    out = jax.block_until_ready(out)
    ref = actor_reference(state, params, max_action)
    assert out.shape == (batch, action_dim)
    assert jnp.allclose(out, ref, atol=5e-2, rtol=5e-2), (out, ref)

    # Larger batch exercising the multi-step batch grid + resident weights.
    big_b = 1536
    big_state = jax.random.normal(k_big, (big_b, state_dim), jnp.float32)
    big_out = jax.block_until_ready(actor_forward(big_state, params, max_action))
    big_ref = actor_reference(big_state, params, max_action)
    assert big_out.shape == (big_b, action_dim)
    assert jnp.allclose(big_out, big_ref, atol=5e-2, rtol=5e-2)

    print("KERNEL_OK")
</pallas_src>

<mosaic_0001>
module attributes {stable_mosaic.version = 11 : i64} {
  func.func @kernel(%arg0: i32, %arg1: memref<16x16xbf16, #tpu.memory_space<vmem>>, %arg2: memref<16x32xbf16, #tpu.memory_space<vmem>>, %arg3: memref<1x32xf32, #tpu.memory_space<vmem>>, %arg4: memref<32x32xbf16, #tpu.memory_space<vmem>>, %arg5: memref<1x32xf32, #tpu.memory_space<vmem>>, %arg6: memref<32x128xbf16, #tpu.memory_space<vmem>>, %arg7: memref<1x128xf32, #tpu.memory_space<vmem>>, %arg8: memref<16x128xf32, #tpu.memory_space<vmem>>) attributes {dimension_semantics = [#tpu.dimension_semantics<parallel>], iteration_bounds = array<i64: 1>, scalar_prefetch = 0 : i64, scratch_operands = 0 : i64, tpu.core_type = #tpu.core_type<tc>, window_params = [{transform_indices = @transform_0, window_bounds = array<i64: 16, 16>}, {pipeline_mode = #tpu.pipeline_mode<synchronous>, transform_indices = @transform_1, window_bounds = array<i64: 16, 32>}, {pipeline_mode = #tpu.pipeline_mode<synchronous>, transform_indices = @transform_2, window_bounds = array<i64: 1, 32>}, {pipeline_mode = #tpu.pipeline_mode<synchronous>, transform_indices = @transform_3, window_bounds = array<i64: 32, 32>}, {pipeline_mode = #tpu.pipeline_mode<synchronous>, transform_indices = @transform_4, window_bounds = array<i64: 1, 32>}, {pipeline_mode = #tpu.pipeline_mode<synchronous>, transform_indices = @transform_5, window_bounds = array<i64: 32, 128>}, {pipeline_mode = #tpu.pipeline_mode<synchronous>, transform_indices = @transform_6, window_bounds = array<i64: 1, 128>}, {transform_indices = @transform_7, window_bounds = array<i64: 16, 128>}]} {
    %c0 = arith.constant 0 : index
    %c0_0 = arith.constant 0 : index
    %0 = vector.load %arg1[%c0, %c0_0] : memref<16x16xbf16, #tpu.memory_space<vmem>>, vector<16x16xbf16>
    %c0_1 = arith.constant 0 : index
    %c0_2 = arith.constant 0 : index
    %1 = vector.load %arg2[%c0_1, %c0_2] : memref<16x32xbf16, #tpu.memory_space<vmem>>, vector<16x32xbf16>
    %cst = arith.constant dense<0.000000e+00> : vector<16x32xf32>
    %2 = tpu.matmul %0, %1, %cst {dimension_numbers = #tpu.dot_dimension_numbers<[1], [0], [0], [1], [0, 0, 1, 1], [], []>} : vector<16x16xbf16>, vector<16x32xbf16>, vector<16x32xf32> -> vector<16x32xf32>
    %c0_3 = arith.constant 0 : index
    %c0_4 = arith.constant 0 : index
    %3 = vector.load %arg3[%c0_3, %c0_4] : memref<1x32xf32, #tpu.memory_space<vmem>>, vector<1x32xf32>
    %4 = vector.broadcast %3 : vector<1x32xf32> to vector<16x32xf32>
    %5 = arith.addf %2, %4 : vector<16x32xf32>
    %cst_5 = arith.constant 0.000000e+00 : f32
    %6 = vector.broadcast %cst_5 : f32 to vector<16x32xf32>
    %7 = arith.maximumf %5, %6 : vector<16x32xf32>
    %8 = arith.truncf %7 : vector<16x32xf32> to vector<16x32xbf16>
    %c0_6 = arith.constant 0 : index
    %c0_7 = arith.constant 0 : index
    %9 = vector.load %arg4[%c0_6, %c0_7] : memref<32x32xbf16, #tpu.memory_space<vmem>>, vector<32x32xbf16>
    %cst_8 = arith.constant dense<0.000000e+00> : vector<16x32xf32>
    %10 = tpu.matmul %8, %9, %cst_8 {dimension_numbers = #tpu.dot_dimension_numbers<[1], [0], [0], [1], [0, 0, 1, 1], [], []>} : vector<16x32xbf16>, vector<32x32xbf16>, vector<16x32xf32> -> vector<16x32xf32>
    %c0_9 = arith.constant 0 : index
    %c0_10 = arith.constant 0 : index
    %11 = vector.load %arg5[%c0_9, %c0_10] : memref<1x32xf32, #tpu.memory_space<vmem>>, vector<1x32xf32>
    %12 = vector.broadcast %11 : vector<1x32xf32> to vector<16x32xf32>
    %13 = arith.addf %10, %12 : vector<16x32xf32>
    %cst_11 = arith.constant 0.000000e+00 : f32
    %14 = vector.broadcast %cst_11 : f32 to vector<16x32xf32>
    %15 = arith.maximumf %13, %14 : vector<16x32xf32>
    %16 = arith.truncf %15 : vector<16x32xf32> to vector<16x32xbf16>
    %c0_12 = arith.constant 0 : index
    %c0_13 = arith.constant 0 : index
    %17 = vector.load %arg6[%c0_12, %c0_13] : memref<32x128xbf16, #tpu.memory_space<vmem>>, vector<32x128xbf16>
    %cst_14 = arith.constant dense<0.000000e+00> : vector<16x128xf32>
    %18 = tpu.matmul %16, %17, %cst_14 {dimension_numbers = #tpu.dot_dimension_numbers<[1], [0], [0], [1], [0, 0, 1, 1], [], []>} : vector<16x32xbf16>, vector<32x128xbf16>, vector<16x128xf32> -> vector<16x128xf32>
    %c0_15 = arith.constant 0 : index
    %c0_16 = arith.constant 0 : index
    %19 = vector.load %arg7[%c0_15, %c0_16] : memref<1x128xf32, #tpu.memory_space<vmem>>, vector<1x128xf32>
    %20 = vector.broadcast %19 : vector<1x128xf32> to vector<16x128xf32>
    %21 = arith.addf %18, %20 : vector<16x128xf32>
    %22 = math.tanh %21 : vector<16x128xf32>
    %cst_17 = arith.constant 2.000000e+00 : f32
    %23 = vector.broadcast %cst_17 : f32 to vector<16x128xf32>
    %24 = arith.mulf %23, %22 : vector<16x128xf32>
    %c0_18 = arith.constant 0 : index
    %c0_19 = arith.constant 0 : index
    %25 = vector.load %arg8[%c0_18, %c0_19] : memref<16x128xf32, #tpu.memory_space<vmem>>, vector<16x128xf32>
    tpu.vector_store %arg8[%c0_18, %c0_19], %24 {strides = array<i32>} : memref<16x128xf32, #tpu.memory_space<vmem>>, vector<16x128xf32>,
    return
  }
  func.func @transform_0(%arg0: i32) -> (i32, i32) {
    %c0_i32 = arith.constant 0 : i32
    %c0_i32_0 = arith.constant 0 : i32
    return %arg0, %c0_i32 : i32, i32
  }
  func.func @transform_1(%arg0: i32) -> (i32, i32) {
    %c0_i32 = arith.constant 0 : i32
    %c0_i32_0 = arith.constant 0 : i32
    %c0_i32_1 = arith.constant 0 : i32
    return %c0_i32, %c0_i32_0 : i32, i32
  }
  func.func @transform_2(%arg0: i32) -> (i32, i32) {
    %c0_i32 = arith.constant 0 : i32
    %c0_i32_0 = arith.constant 0 : i32
    %c0_i32_1 = arith.constant 0 : i32
    return %c0_i32, %c0_i32_0 : i32, i32
  }
  func.func @transform_3(%arg0: i32) -> (i32, i32) {
    %c0_i32 = arith.constant 0 : i32
    %c0_i32_0 = arith.constant 0 : i32
    %c0_i32_1 = arith.constant 0 : i32
    return %c0_i32, %c0_i32_0 : i32, i32
  }
  func.func @transform_4(%arg0: i32) -> (i32, i32) {
    %c0_i32 = arith.constant 0 : i32
    %c0_i32_0 = arith.constant 0 : i32
    %c0_i32_1 = arith.constant 0 : i32
    return %c0_i32, %c0_i32_0 : i32, i32
  }
  func.func @transform_5(%arg0: i32) -> (i32, i32) {
    %c0_i32 = arith.constant 0 : i32
    %c0_i32_0 = arith.constant 0 : i32
    %c0_i32_1 = arith.constant 0 : i32
    return %c0_i32, %c0_i32_0 : i32, i32
  }
  func.func @transform_6(%arg0: i32) -> (i32, i32) {
    %c0_i32 = arith.constant 0 : i32
    %c0_i32_0 = arith.constant 0 : i32
    %c0_i32_1 = arith.constant 0 : i32
    return %c0_i32, %c0_i32_0 : i32, i32
  }
  func.func @transform_7(%arg0: i32) -> (i32, i32) {
    %c0_i32 = arith.constant 0 : i32
    %c0_i32_0 = arith.constant 0 : i32
    return %arg0, %c0_i32 : i32, i32
  }
}

</mosaic_0001>

<llo_original>
// kernel: actor_forward.1
$region0: #{actor_forward.1}
  #allocation0 [shape = 'u32[]', space=smem, size = 0x4, offset = 0x4, fixed_abs, tag = 'smem constant byte address 0x4 - core index']
  #allocation1 [shape = 'u32[72,128]{1,0:T(1,128)}', space=vmem, size = 0x9000, scoped, tag = 'internal scratch']
  %s0 = inlined_call_operand.vmem [shape: bf16[16,16], index: 0, kind: input, shape index: {}]
  %s1 = inlined_call_operand.vmem [shape: bf16[16,32], index: 1, kind: input, shape index: {}]
  %s2 = inlined_call_operand.vmem [shape: f32[1,32], index: 2, kind: input, shape index: {}]
  %s3 = inlined_call_operand.vmem [shape: bf16[32,32], index: 3, kind: input, shape index: {}]
  %s4 = inlined_call_operand.vmem [shape: f32[1,32], index: 4, kind: input, shape index: {}]
  %s5 = inlined_call_operand.vmem [shape: bf16[32,128], index: 5, kind: input, shape index: {}]
  %s6 = inlined_call_operand.vmem [shape: f32[1,128], index: 6, kind: input, shape index: {}]
  %s7 = inlined_call_operand.vmem [shape: f32[16,128], index: 7, kind: output, shape index: {}]
  %s8 = sld [smem:[#allocation0]]
  $region38: #{actor_forward.1} parent=0
    _
  %s10 = ssub.s32 1, %s8
  %s11 = scalar_select 0, %s10, %s8
  // Predicated region
  $region2: #{actor_forward.1} parent=0 // pred_check
    _
  $region3: #{actor_forward.1} parent=0 // pred_check_branch
    %13 = sbr.rel (0) target = $region5
  $region4: #{actor_forward.1} parent=0 // pred_region
    _
  $region5: #{actor_forward.1} parent=0 // pred_fallthru
    _
  // Predicated region
  $region6: #{actor_forward.1} parent=0 // pred_check
    _
  $region7: #{actor_forward.1} parent=0 // pred_check_branch
    %15 = sbr.rel (0) target = $region9
  $region8: #{actor_forward.1} parent=0 // pred_region
    _
  $region9: #{actor_forward.1} parent=0 // pred_fallthru
    _
  // Predicated region
  $region10: #{actor_forward.1} parent=0 // pred_check
    _
  $region11: #{actor_forward.1} parent=0 // pred_check_branch
    %17 = sbr.rel (0) target = $region13
  $region12: #{actor_forward.1} parent=0 // pred_region
    _
  $region13: #{actor_forward.1} parent=0 // pred_fallthru
    _
  // Predicated region
  $region14: #{actor_forward.1} parent=0 // pred_check
    _
  $region15: #{actor_forward.1} parent=0 // pred_check_branch
    %19 = sbr.rel (0) target = $region17
  $region16: #{actor_forward.1} parent=0 // pred_region
    _
  $region17: #{actor_forward.1} parent=0 // pred_fallthru
    _
  // Predicated region
  $region18: #{actor_forward.1} parent=0 // pred_check
    _
  $region19: #{actor_forward.1} parent=0 // pred_check_branch
    %21 = sbr.rel (0) target = $region21
  $region20: #{actor_forward.1} parent=0 // pred_region
    _
  $region21: #{actor_forward.1} parent=0 // pred_fallthru
    _
  // Predicated region
  $region22: #{actor_forward.1} parent=0 // pred_check
    _
  $region23: #{actor_forward.1} parent=0 // pred_check_branch
    %23 = sbr.rel (0) target = $region25
  $region24: #{actor_forward.1} parent=0 // pred_region
    _
  $region25: #{actor_forward.1} parent=0 // pred_fallthru
    _
  // Predicated region
  $region26: #{actor_forward.1} parent=0 // pred_check
    _
  $region27: #{actor_forward.1} parent=0 // pred_check_branch
    %25 = sbr.rel (0) target = $region29
  $region28: #{actor_forward.1} parent=0 // pred_region
    _
  $region29: #{actor_forward.1} parent=0 // pred_fallthru
    _
  %v27 = vld [vmem:[%s0] sm:$0xf]
  %v28 = vld [vmem:[%s0 + $0x4] sm:$0xf]
  %v29 = vld [vmem:[%s1] sm:$0xf]
  %v30 = vld [vmem:[%s1 + $0x4] sm:$0xf]
  %v31 = vld [vmem:[%s2] sm:$0x1]
  %v33 = vperm.slane %v31, 0
  %v37 = vunpack.c.l.b16 %v27
  %v38 = vunpack.c.l.b16 %v28
  %v39 = vpack.c.b16 %v38, %v37
  %v42 = vunpack.c.l.b16 %v29
  %v43 = vunpack.c.l.b16 %v30
  %v44 = vpack.c.b16 %v43, %v42
  %vm46 = vcmask 130048
  %v48 = vsel %vm46, %v39, 0
  %50 = vmatpush.bf16.msra.mxu0 0
  %51 = vmatpush.bf16.msra.mxu0 0
  %52 = vmatpush.bf16.msra.mxu0 0
  %53 = vmatpush.bf16.msra.mxu0 0
  %54 = vmatpush.bf16.msra.mxu0 0
  %55 = vmatpush.bf16.msra.mxu0 0
  %56 = vmatpush.bf16.msra.mxu0 0
  %57 = vmatpush.bf16.msra.mxu0 %v44
  %58 = vmatmul.bf16.gmra.mxu0 %v48
  %v59 = vpop.f32.mrf.mxu0
  %v60 = vadd.f32 %v33, %v59
  %v61 = vpop.f32.mrf.mxu0
  %v62 = vadd.f32 %v33, %v61
  %63 = vdwg.mxu0
  %v64 = vmax.f32 %v60, 0.0
  %v65 = vmax.f32 %v62, 0.0
  %v66 = vpack.c.bf16 %v65, %v64
  %v67 = vld [vmem:[%s3] sm:$0xf]
  %v68 = vld [vmem:[%s3 + $0x4] sm:$0xf]
  %v69 = vld [vmem:[%s3 + $0x8] sm:$0xf]
  %v70 = vld [vmem:[%s3 + $0xc] sm:$0xf]
  %v71 = vld [vmem:[%s4] sm:$0x1]
  %v73 = vperm.slane %v71, 0
  %v79 = vunpack.c.l.b16 %v67
  %v80 = vunpack.c.l.b16 %v68
  %v81 = vunpack.c.l.b16 %v69
  %v82 = vunpack.c.l.b16 %v70
  %v83 = vpack.c.b16 %v80, %v79
  %v84 = vpack.c.b16 %v82, %v81
  %vm87 = vcmask 261120
  %v89 = vsel %vm87, %v66, 0
  %91 = vmatpush.bf16.msra.mxu0 0
  %92 = vmatpush.bf16.msra.mxu0 0
  %93 = vmatpush.bf16.msra.mxu0 0
  %94 = vmatpush.bf16.msra.mxu0 0
  %95 = vmatpush.bf16.msra.mxu0 0
  %96 = vmatpush.bf16.msra.mxu0 0
  %97 = vmatpush.bf16.msra.mxu0 %v84
  %98 = vmatpush.bf16.msra.mxu0 %v83
  %99 = vmatmul.bf16.gmra.mxu0 %v89
  %v100 = vpop.f32.mrf.mxu0
  %v101 = vadd.f32 %v73, %v100
  %v102 = vpop.f32.mrf.mxu0
  %v103 = vadd.f32 %v73, %v102
  %104 = vdwg.mxu0
  %v105 = vmax.f32 %v101, 0.0
  %v106 = vmax.f32 %v103, 0.0
  %v107 = vpack.c.bf16 %v106, %v105
  %v108 = vld [vmem:[%s5] sm:$0xf]
  %v109 = vld [vmem:[%s5 + $0x4] sm:$0xf]
  %v110 = vld [vmem:[%s5 + $0x8] sm:$0xf]
  %v111 = vld [vmem:[%s5 + $0xc] sm:$0xf]
  %v112 = vld [vmem:[%s6] sm:$0x1]
  %v114 = vperm.slane %v112, 0
  %v120 = vunpack.c.l.b16 %v108
  %v121 = vunpack.c.l.b16 %v109
  %v122 = vunpack.c.l.b16 %v110
  %v123 = vunpack.c.l.b16 %v111
  %v124 = vpack.c.b16 %v121, %v120
  %v125 = vpack.c.b16 %v123, %v122
  %v129 = vsel %vm87, %v107, 0
  %131 = vmatpush.bf16.msra.mxu0 0
  %132 = vmatpush.bf16.msra.mxu0 0
  %133 = vmatpush.bf16.msra.mxu0 0
  %134 = vmatpush.bf16.msra.mxu0 0
  %135 = vmatpush.bf16.msra.mxu0 0
  %136 = vmatpush.bf16.msra.mxu0 0
  %137 = vmatpush.bf16.msra.mxu0 %v125
  %138 = vmatpush.bf16.msra.mxu0 %v124
  %139 = vmatmul.bf16.gmra.mxu0 %v129
  %v140 = vpop.f32.mrf.mxu0
  %v141 = vadd.f32 %v114, %v140
  %v142 = vpop.f32.mrf.mxu0
  %v143 = vadd.f32 %v114, %v142
  %144 = vdwg.mxu0
  %v145 = vtanh.pop %v141
  %v146 = vtanh.pop %v143
  %v147 = vmul.f32 %v145, 2.0
  %v148 = vmul.f32 %v146, 2.0
  %149 = vst [vmem:[%s7] sm:$0xff] %v147
  %150 = vst [vmem:[%s7 + $0x8] sm:$0xff] %v148
  // Predicated region
  $region30: #{actor_forward.1} parent=0 // pred_check
    _
  $region31: #{actor_forward.1} parent=0 // pred_check_branch
    %152 = sbr.rel (0) target = $region33
  $region32: #{actor_forward.1} parent=0 // pred_region
    _
  $region33: #{actor_forward.1} parent=0 // pred_fallthru
    _
  // Predicated region
  $region34: #{actor_forward.1} parent=0 // pred_check
    _
  $region35: #{actor_forward.1} parent=0 // pred_check_branch
    %154 = sbr.rel (0) target = $region37
  $region36: #{actor_forward.1} parent=0 // pred_region
    _
  $region37: #{actor_forward.1} parent=0 // pred_fallthru
    _

</llo_original>
